<compile_context>
chip_gen: v5e
topology: v5e:2x2
jax: 0.10.0
libtpu: 0.0.40
codegen_flags: <defaults>
</compile_context>

<pallas_src>
import jax
import jax.numpy as jnp
from jax.experimental import pallas as pl
from jax.experimental.pallas import tpu as pltpu


LANE = 128  # lane-dense padded width of the logits output slab


def applecider_kernel(
    pool_ref,                 # (Bt, F+2)   [masked-mean pooled photometry, gate, 1]
    imm_ref,                  # (Bt, C+M+1) [image GAP, metadata, 1]
    spec_ref,                 # (Bt, Ls)
    w_p_ref,                  # (F+2, 5)    folded photometry encoder+proj (+gate/bias rows)
    w_sp_ref, b_sp_ref,       # (Ls, 256), (1, 256)   spectra encoder (stand-in)
    w_spr_ref, b_spr_ref,     # (256, 5), (1, 5)      spectra_proj
    w_im_ref,                 # (C+M+1, 5)  image+metadata encoder (bias folded)
    w_fc_p_ref, w_fc_s_ref, w_fc_im_ref, b_fc_ref,   # fc head, padded to LANE classes
    logits_ref,               # (Bt, LANE)  lane-dense output slab
):
    f32 = jnp.float32

    # Activations arrive in bf16 (HBM-byte bound stream); upcast immediately (v5e has
    # no bf16 VALU), all matmuls accumulate in f32 on the MXU.
    pooled = pool_ref[...].astype(f32)     # (Bt, F+2)
    imm = imm_ref[...].astype(f32)         # (Bt, C+M+1)
    spec = spec_ref[...].astype(f32)       # (Bt, Ls)

    # photometry: folded encoder+projection -> p_emb = gate*(pooled@w_pe + b_pe)@w_pp + b_pp
    p_emb = jnp.dot(pooled, w_p_ref[...], preferred_element_type=f32)          # (Bt, 5)

    # spectra encoder (stand-in SpectraNetBlock): linear + ReLU, then projection
    s_enc = jnp.maximum(
        jnp.dot(spec, w_sp_ref[...], preferred_element_type=f32) + b_sp_ref[...], 0.0)
    s_emb = jnp.dot(s_enc, w_spr_ref[...], preferred_element_type=f32) + b_spr_ref[...]

    # image + metadata encoder (stand-in astroMiNN): GAP done outside, bias folded
    im_emb = jnp.dot(imm, w_im_ref[...], preferred_element_type=f32)           # (Bt, 5)

    # L2 normalize along dim=-1 — rsqrt goes to the EUP slot; eps avoids 0/0 NaN.
    def l2norm(x):
        return x * jax.lax.rsqrt(jnp.sum(x * x, axis=-1, keepdims=True) + 1e-12)

    p_emb = l2norm(p_emb)
    s_emb = l2norm(s_emb)
    im_emb = l2norm(im_emb)

    # fusion == 'concat': logits = fc(cat([p_emb, s_emb, im_emb], dim=1)), as split matmuls
    # into a lane-dense padded slab (columns >= num_classes are zero-padded weights).
    logits = (jnp.dot(p_emb, w_fc_p_ref[...], preferred_element_type=f32)
              + jnp.dot(s_emb, w_fc_s_ref[...], preferred_element_type=f32)
              + jnp.dot(im_emb, w_fc_im_ref[...], preferred_element_type=f32)
              + b_fc_ref[...])
    logits_ref[...] = logits.astype(logits_ref.dtype)


def init_params(key, *, F, D, Ls, C, M, num_classes):
    """Deterministic synthetic parameter init (Kaiming-uniform-ish scaling)."""
    ks = jax.random.split(key, 10)

    def lin(k, fan_in, fan_out):
        kw, kb = jax.random.split(k)
        s = 1.0 / jnp.sqrt(jnp.float32(fan_in))
        w = jax.random.uniform(kw, (fan_in, fan_out), jnp.float32, -s, s)
        b = jax.random.uniform(kb, (1, fan_out), jnp.float32, -s, s)
        return w, b

    p = {}
    p["w_pe"], p["b_pe"] = lin(ks[0], F, D)            # photometry encoder embed
    p["w_sp"], p["b_sp"] = lin(ks[1], Ls, 256)         # spectra encoder
    w_im, p["b_im"] = lin(ks[2], C + M, 5)             # image+metadata encoder -> 5
    p["w_im_img"], p["w_im_meta"] = w_im[:C], w_im[C:]
    p["w_pp"], p["b_pp"] = lin(ks[3], D, 5)            # photometry_proj
    p["w_spr"], p["b_spr"] = lin(ks[4], 256, 5)        # spectra_proj
    w_fc, p["b_fc"] = lin(ks[5], 15, num_classes)      # fc over concat([p, s, im])
    p["w_fc_p"], p["w_fc_s"], p["w_fc_im"] = w_fc[0:5], w_fc[5:10], w_fc[10:15]
    return p


def _round_up(x, m):
    return ((x + m - 1) // m) * m


def _choose_batch_tile(B):
    # Mem/overhead bound kernel: pick the biggest tile (per-step overhead ~0.35us),
    # but keep >= 2 grid steps when possible so the "parallel" grid axis can shard
    # across v7x's two TensorCores. 16-row granularity satisfies the bf16 (16,128)
    # and f32 (8,128) sublane rules for partial batch blocks. VMEM per step at 512
    # rows is only a few MiB here, so no further constraint is needed.
    if B <= 16:
        return B
    return min(512, _round_up(pl.cdiv(B, 2), 16))


def applecider_forward(photometry, photometry_mask, metadata, images, spectra, params,
                       *, batch_tile=None, activation_dtype=jnp.bfloat16):
    f32 = jnp.float32
    hp = jax.lax.Precision.HIGHEST
    B, L, F = photometry.shape
    M = metadata.shape[1]
    C = images.shape[1]
    Ls = spectra.shape[1]
    num_classes = params["b_fc"].shape[1]

    # ---------------- wrapper-side pre-reductions (plain XLA, HBM roofline) ----------------
    # photometry masked mean over L (was lane-sparse with F=4 lanes inside the kernel)
    mask = photometry_mask.astype(f32)
    msum = jnp.sum(mask, axis=1, keepdims=True)
    pooled = jnp.sum(photometry.astype(f32) * mask[..., None], axis=1) / jnp.maximum(msum, 1.0)
    gate = (msum > 0.0).astype(f32)                     # fully-masked rows -> zero embedding
    ones = jnp.ones((B, 1), f32)
    pool_aug = jnp.concatenate([pooled, gate, ones], axis=1)          # (B, F+2)

    # image global-average-pool + metadata merge (+ ones column folds b_im)
    gap = jnp.mean(images.astype(f32), axis=(2, 3))                   # (B, C)
    imm_in = jnp.concatenate([gap, metadata.astype(f32), ones], axis=1)   # (B, C+M+1)

    # ---------------- parameter folding / packing ----------------
    # TODO(synk): this fold is only exact while the stand-in photometry encoder is purely
    #             linear (no nonlinearity/dropout/LN between embed and projection).
    w_p_eff = jnp.concatenate([
        jnp.dot(params["w_pe"], params["w_pp"], precision=hp),        # pooled rows
        jnp.dot(params["b_pe"], params["w_pp"], precision=hp),        # gate row
        params["b_pp"],                                               # ones row
    ], axis=0).astype(f32)                                            # (F+2, 5)
    w_im_eff = jnp.concatenate(
        [params["w_im_img"], params["w_im_meta"], params["b_im"]], axis=0).astype(f32)  # (C+M+1, 5)

    # Pad the fc head to a lane-dense (.., LANE) output width; slice back after the call.
    def pad_n(w):
        return jnp.zeros((w.shape[0], LANE), f32).at[:, :num_classes].set(w)

    w_fc_p = pad_n(params["w_fc_p"])
    w_fc_s = pad_n(params["w_fc_s"])
    w_fc_im = pad_n(params["w_fc_im"])
    b_fc = pad_n(params["b_fc"])

    # Activations streamed in bf16 (halves HBM bytes of the mem-bound kernel); weights f32.
    pool_aug = pool_aug.astype(activation_dtype)
    imm_in = imm_in.astype(activation_dtype)
    spec_in = spectra.astype(activation_dtype)

    Fa = pool_aug.shape[1]     # F + 2
    Ia = imm_in.shape[1]       # C + M + 1

    # ---------------- batch tiling ----------------
    if batch_tile is None:
        bt = _choose_batch_tile(B)
    else:
        bt = min(batch_tile, B)
        if bt < B:
            bt = _round_up(bt, 16)
    grid = (pl.cdiv(B, bt),)

    def rows(width):
        # batch-tiled activation block (last dim = full extent -> tiling rule ok)
        return pl.BlockSpec((bt, width), lambda i: (i, 0))

    def full(shape):
        # whole-array weight block; constant index_map -> VMEM-resident across grid steps.
        # TODO(synk): mark pipeline_mode=pl.Buffered(1) if Ls grows into the thousands
        #             (halves weight VMEM), not needed at these sizes.
        return pl.BlockSpec(shape, lambda i: (0, 0))

    in_specs = [
        rows(Fa), rows(Ia), rows(Ls),
        full((Fa, 5)),
        full((Ls, 256)), full((1, 256)),
        full((256, 5)), full((1, 5)),
        full((Ia, 5)),
        full((5, LANE)), full((5, LANE)), full((5, LANE)), full((1, LANE)),
    ]

    # Explicit VMEM budget: ~48 MiB on v7x (64 MiB physical), 64 MiB on v5e/v6e (128 MiB).
    try:
        _cap = int(getattr(pltpu.get_tpu_info(), "vmem_capacity_bytes", 128 << 20))
    except Exception:
        _cap = 128 << 20
    vmem_limit = int(min(64 << 20, max(32 << 20, (_cap * 3) // 4)))

    act_itemsize = jnp.dtype(activation_dtype).itemsize
    weight_bytes = 4 * int(w_p_eff.size + params["w_sp"].size + params["b_sp"].size
                           + params["w_spr"].size + params["b_spr"].size + w_im_eff.size
                           + w_fc_p.size + w_fc_s.size + w_fc_im.size + b_fc.size)
    cost = pl.CostEstimate(
        flops=int(2 * B * (Fa * 5 + Ls * 256 + 256 * 5 + Ia * 5 + 3 * 5 * LANE)),
        transcendentals=int(3 * B),
        bytes_accessed=int(B * (Fa + Ia + Ls) * act_itemsize + B * LANE * 4 + weight_bytes),
    )

    padded_logits = pl.pallas_call(
        applecider_kernel,
        out_shape=jax.ShapeDtypeStruct((B, LANE), jnp.float32),
        grid=grid,
        in_specs=in_specs,
        out_specs=pl.BlockSpec((bt, LANE), lambda i: (i, 0)),
        compiler_params=pltpu.CompilerParams(
            dimension_semantics=("parallel",),
            vmem_limit_bytes=vmem_limit),
        cost_estimate=cost,
    )(pool_aug, imm_in, spec_in,
      w_p_eff,
      params["w_sp"], params["b_sp"],
      params["w_spr"], params["b_spr"],
      w_im_eff,
      w_fc_p, w_fc_s, w_fc_im, b_fc)

    return padded_logits[:, :num_classes]


def reference_forward(photometry, photometry_mask, metadata, images, spectra, params):
    """Pure-JAX reference of the same (stand-in) forward pass, f32-accurate matmuls."""
    hp = jax.lax.Precision.HIGHEST
    mask = photometry_mask
    msum = jnp.sum(mask, axis=1, keepdims=True)
    pooled = jnp.sum(photometry * mask[..., None], axis=1) / jnp.maximum(msum, 1.0)
    p_enc = (jnp.dot(pooled, params["w_pe"], precision=hp) + params["b_pe"])
    p_enc = p_enc * (msum > 0.0).astype(jnp.float32)
    s_enc = jnp.maximum(jnp.dot(spectra, params["w_sp"], precision=hp) + params["b_sp"], 0.0)
    gap = jnp.mean(images, axis=(2, 3))
    im_emb = (jnp.dot(gap, params["w_im_img"], precision=hp)
              + jnp.dot(metadata, params["w_im_meta"], precision=hp) + params["b_im"])
    p_emb = jnp.dot(p_enc, params["w_pp"], precision=hp) + params["b_pp"]
    s_emb = jnp.dot(s_enc, params["w_spr"], precision=hp) + params["b_spr"]

    def l2n(x):
        return x / jnp.sqrt(jnp.sum(x * x, axis=-1, keepdims=True) + 1e-12)

    p_emb, s_emb, im_emb = l2n(p_emb), l2n(s_emb), l2n(im_emb)
    return (jnp.dot(p_emb, params["w_fc_p"], precision=hp)
            + jnp.dot(s_emb, params["w_fc_s"], precision=hp)
            + jnp.dot(im_emb, params["w_fc_im"], precision=hp) + params["b_fc"])


if __name__ == "__main__":
    # Small config consistent with the module's interface.
    B, L, F = 2, 8, 4          # photometry: batch, max_len, features per observation
    D = 32                     # p_d_model
    Ls = 64                    # spectra length
    C, H, W = 3, 16, 16        # images (NCHW)
    M = 8                      # metadata features
    num_classes = 6

    key = jax.random.PRNGKey(0)
    k_in, k_par = jax.random.split(key)
    kp, km, kmd, kim, ksp = jax.random.split(k_in, 5)

    photometry = jax.random.normal(kp, (B, L, F), jnp.float32)
    # 1.0 = valid observation, 0.0 = padding; keep at least half the sequence valid.
    photometry_mask = (jax.random.uniform(km, (B, L)) < 0.75).astype(jnp.float32)
    photometry_mask = photometry_mask.at[:, : L // 2].set(1.0)
    metadata = jax.random.normal(kmd, (B, M), jnp.float32)
    images = jax.random.normal(kim, (B, C, H, W), jnp.float32)
    spectra = jax.random.normal(ksp, (B, Ls), jnp.float32)

    params = init_params(k_par, F=F, D=D, Ls=Ls, C=C, M=M, num_classes=num_classes)

    ref = reference_forward(photometry, photometry_mask, metadata, images, spectra, params)

    # Default path: bf16-streamed activations (slightly looser numerics).
    logits = applecider_forward(photometry, photometry_mask, metadata, images, spectra, params)
    logits = jax.block_until_ready(logits)
    assert logits.shape == (B, num_classes)
    assert bool(jnp.all(jnp.isfinite(logits)))
    assert bool(jnp.allclose(logits, ref, atol=2e-2, rtol=2e-2))

    # f32-streamed path for a tight numerical check against the reference.
    logits_f32 = jax.block_until_ready(
        applecider_forward(photometry, photometry_mask, metadata, images, spectra, params,
                           activation_dtype=jnp.float32))
    assert bool(jnp.allclose(logits_f32, ref, atol=2e-3, rtol=2e-3))

    print("KERNEL_OK")
</pallas_src>

<mosaic_0001>
module attributes {stable_mosaic.version = 11 : i64} {
  func.func @applecider_kernel(%arg0: i32, %arg1: memref<2x6xbf16, #tpu.memory_space<vmem>>, %arg2: memref<2x12xbf16, #tpu.memory_space<vmem>>, %arg3: memref<2x64xbf16, #tpu.memory_space<vmem>>, %arg4: memref<6x5xf32, #tpu.memory_space<vmem>>, %arg5: memref<64x256xf32, #tpu.memory_space<vmem>>, %arg6: memref<1x256xf32, #tpu.memory_space<vmem>>, %arg7: memref<256x5xf32, #tpu.memory_space<vmem>>, %arg8: memref<1x5xf32, #tpu.memory_space<vmem>>, %arg9: memref<12x5xf32, #tpu.memory_space<vmem>>, %arg10: memref<5x128xf32, #tpu.memory_space<vmem>>, %arg11: memref<5x128xf32, #tpu.memory_space<vmem>>, %arg12: memref<5x128xf32, #tpu.memory_space<vmem>>, %arg13: memref<1x128xf32, #tpu.memory_space<vmem>>, %arg14: memref<2x128xf32, #tpu.memory_space<vmem>>) attributes {dimension_semantics = [#tpu.dimension_semantics<parallel>], iteration_bounds = array<i64: 1>, scalar_prefetch = 0 : i64, scratch_operands = 0 : i64, tpu.core_type = #tpu.core_type<tc>, window_params = [{transform_indices = @transform_0, window_bounds = array<i64: 2, 6>}, {transform_indices = @transform_1, window_bounds = array<i64: 2, 12>}, {transform_indices = @transform_2, window_bounds = array<i64: 2, 64>}, {pipeline_mode = #tpu.pipeline_mode<synchronous>, transform_indices = @transform_3, window_bounds = array<i64: 6, 5>}, {pipeline_mode = #tpu.pipeline_mode<synchronous>, transform_indices = @transform_4, window_bounds = array<i64: 64, 256>}, {pipeline_mode = #tpu.pipeline_mode<synchronous>, transform_indices = @transform_5, window_bounds = array<i64: 1, 256>}, {pipeline_mode = #tpu.pipeline_mode<synchronous>, transform_indices = @transform_6, window_bounds = array<i64: 256, 5>}, {pipeline_mode = #tpu.pipeline_mode<synchronous>, transform_indices = @transform_7, window_bounds = array<i64: 1, 5>}, {pipeline_mode = #tpu.pipeline_mode<synchronous>, transform_indices = @transform_8, window_bounds = array<i64: 12, 5>}, {pipeline_mode = #tpu.pipeline_mode<synchronous>, transform_indices = @transform_9, window_bounds = array<i64: 5, 128>}, {pipeline_mode = #tpu.pipeline_mode<synchronous>, transform_indices = @transform_10, window_bounds = array<i64: 5, 128>}, {pipeline_mode = #tpu.pipeline_mode<synchronous>, transform_indices = @transform_11, window_bounds = array<i64: 5, 128>}, {pipeline_mode = #tpu.pipeline_mode<synchronous>, transform_indices = @transform_12, window_bounds = array<i64: 1, 128>}, {transform_indices = @transform_13, window_bounds = array<i64: 2, 128>}]} {
    %c0 = arith.constant 0 : index
    %c0_0 = arith.constant 0 : index
    %0 = vector.load %arg1[%c0, %c0_0] : memref<2x6xbf16, #tpu.memory_space<vmem>>, vector<2x6xbf16>
    %1 = arith.extf %0 : vector<2x6xbf16> to vector<2x6xf32>
    %c0_1 = arith.constant 0 : index
    %c0_2 = arith.constant 0 : index
    %2 = vector.load %arg2[%c0_1, %c0_2] : memref<2x12xbf16, #tpu.memory_space<vmem>>, vector<2x12xbf16>
    %3 = arith.extf %2 : vector<2x12xbf16> to vector<2x12xf32>
    %c0_3 = arith.constant 0 : index
    %c0_4 = arith.constant 0 : index
    %4 = vector.load %arg3[%c0_3, %c0_4] : memref<2x64xbf16, #tpu.memory_space<vmem>>, vector<2x64xbf16>
    %5 = arith.extf %4 : vector<2x64xbf16> to vector<2x64xf32>
    %c0_5 = arith.constant 0 : index
    %c0_6 = arith.constant 0 : index
    %6 = vector.load %arg4[%c0_5, %c0_6] : memref<6x5xf32, #tpu.memory_space<vmem>>, vector<6x5xf32>
    %cst = arith.constant dense<0.000000e+00> : vector<2x5xf32>
    %7 = tpu.matmul %1, %6, %cst {dimension_numbers = #tpu.dot_dimension_numbers<[1], [0], [0], [1], [0, 0, 1, 1], [], []>} : vector<2x6xf32>, vector<6x5xf32>, vector<2x5xf32> -> vector<2x5xf32>
    %c0_7 = arith.constant 0 : index
    %c0_8 = arith.constant 0 : index
    %8 = vector.load %arg5[%c0_7, %c0_8] : memref<64x256xf32, #tpu.memory_space<vmem>>, vector<64x256xf32>
    %cst_9 = arith.constant dense<0.000000e+00> : vector<2x256xf32>
    %9 = tpu.matmul %5, %8, %cst_9 {dimension_numbers = #tpu.dot_dimension_numbers<[1], [0], [0], [1], [0, 0, 1, 1], [], []>} : vector<2x64xf32>, vector<64x256xf32>, vector<2x256xf32> -> vector<2x256xf32>
    %c0_10 = arith.constant 0 : index
    %c0_11 = arith.constant 0 : index
    %10 = vector.load %arg6[%c0_10, %c0_11] : memref<1x256xf32, #tpu.memory_space<vmem>>, vector<1x256xf32>
    %11 = vector.broadcast %10 : vector<1x256xf32> to vector<2x256xf32>
    %12 = arith.addf %9, %11 : vector<2x256xf32>
    %cst_12 = arith.constant 0.000000e+00 : f32
    %13 = vector.broadcast %cst_12 : f32 to vector<2x256xf32>
    %14 = arith.maximumf %12, %13 : vector<2x256xf32>
    %c0_13 = arith.constant 0 : index
    %c0_14 = arith.constant 0 : index
    %15 = vector.load %arg7[%c0_13, %c0_14] : memref<256x5xf32, #tpu.memory_space<vmem>>, vector<256x5xf32>
    %cst_15 = arith.constant dense<0.000000e+00> : vector<2x5xf32>
    %16 = tpu.matmul %14, %15, %cst_15 {dimension_numbers = #tpu.dot_dimension_numbers<[1], [0], [0], [1], [0, 0, 1, 1], [], []>} : vector<2x256xf32>, vector<256x5xf32>, vector<2x5xf32> -> vector<2x5xf32>
    %c0_16 = arith.constant 0 : index
    %c0_17 = arith.constant 0 : index
    %17 = vector.load %arg8[%c0_16, %c0_17] : memref<1x5xf32, #tpu.memory_space<vmem>>, vector<1x5xf32>
    %18 = vector.broadcast %17 : vector<1x5xf32> to vector<2x5xf32>
    %19 = arith.addf %16, %18 : vector<2x5xf32>
    %c0_18 = arith.constant 0 : index
    %c0_19 = arith.constant 0 : index
    %20 = vector.load %arg9[%c0_18, %c0_19] : memref<12x5xf32, #tpu.memory_space<vmem>>, vector<12x5xf32>
    %cst_20 = arith.constant dense<0.000000e+00> : vector<2x5xf32>
    %21 = tpu.matmul %3, %20, %cst_20 {dimension_numbers = #tpu.dot_dimension_numbers<[1], [0], [0], [1], [0, 0, 1, 1], [], []>} : vector<2x12xf32>, vector<12x5xf32>, vector<2x5xf32> -> vector<2x5xf32>
    %22 = arith.mulf %7, %7 : vector<2x5xf32>
    %cst_21 = arith.constant dense<0.000000e+00> : vector<2xf32>
    %23 = vector.multi_reduction <add>, %22, %cst_21 [1] : vector<2x5xf32> to vector<2xf32>
    %24 = vector.shape_cast %23 : vector<2xf32> to vector<2x1xf32>
    %cst_22 = arith.constant 9.99999996E-13 : f32
    %25 = vector.broadcast %cst_22 : f32 to vector<2x1xf32>
    %26 = arith.addf %24, %25 : vector<2x1xf32>
    %27 = math.rsqrt %26 : vector<2x1xf32>
    %28 = vector.broadcast %27 : vector<2x1xf32> to vector<2x5xf32>
    %29 = arith.mulf %7, %28 : vector<2x5xf32>
    %30 = arith.mulf %19, %19 : vector<2x5xf32>
    %cst_23 = arith.constant dense<0.000000e+00> : vector<2xf32>
    %31 = vector.multi_reduction <add>, %30, %cst_23 [1] : vector<2x5xf32> to vector<2xf32>
    %32 = vector.shape_cast %31 : vector<2xf32> to vector<2x1xf32>
    %cst_24 = arith.constant 9.99999996E-13 : f32
    %33 = vector.broadcast %cst_24 : f32 to vector<2x1xf32>
    %34 = arith.addf %32, %33 : vector<2x1xf32>
    %35 = math.rsqrt %34 : vector<2x1xf32>
    %36 = vector.broadcast %35 : vector<2x1xf32> to vector<2x5xf32>
    %37 = arith.mulf %19, %36 : vector<2x5xf32>
    %38 = arith.mulf %21, %21 : vector<2x5xf32>
    %cst_25 = arith.constant dense<0.000000e+00> : vector<2xf32>
    %39 = vector.multi_reduction <add>, %38, %cst_25 [1] : vector<2x5xf32> to vector<2xf32>
    %40 = vector.shape_cast %39 : vector<2xf32> to vector<2x1xf32>
    %cst_26 = arith.constant 9.99999996E-13 : f32
    %41 = vector.broadcast %cst_26 : f32 to vector<2x1xf32>
    %42 = arith.addf %40, %41 : vector<2x1xf32>
    %43 = math.rsqrt %42 : vector<2x1xf32>
    %44 = vector.broadcast %43 : vector<2x1xf32> to vector<2x5xf32>
    %45 = arith.mulf %21, %44 : vector<2x5xf32>
    %c0_27 = arith.constant 0 : index
    %c0_28 = arith.constant 0 : index
    %46 = vector.load %arg10[%c0_27, %c0_28] : memref<5x128xf32, #tpu.memory_space<vmem>>, vector<5x128xf32>
    %cst_29 = arith.constant dense<0.000000e+00> : vector<2x128xf32>
    %47 = tpu.matmul %29, %46, %cst_29 {dimension_numbers = #tpu.dot_dimension_numbers<[1], [0], [0], [1], [0, 0, 1, 1], [], []>} : vector<2x5xf32>, vector<5x128xf32>, vector<2x128xf32> -> vector<2x128xf32>
    %c0_30 = arith.constant 0 : index
    %c0_31 = arith.constant 0 : index
    %48 = vector.load %arg11[%c0_30, %c0_31] : memref<5x128xf32, #tpu.memory_space<vmem>>, vector<5x128xf32>
    %cst_32 = arith.constant dense<0.000000e+00> : vector<2x128xf32>
    %49 = tpu.matmul %37, %48, %cst_32 {dimension_numbers = #tpu.dot_dimension_numbers<[1], [0], [0], [1], [0, 0, 1, 1], [], []>} : vector<2x5xf32>, vector<5x128xf32>, vector<2x128xf32> -> vector<2x128xf32>
    %50 = arith.addf %47, %49 : vector<2x128xf32>
    %c0_33 = arith.constant 0 : index
    %c0_34 = arith.constant 0 : index
    %51 = vector.load %arg12[%c0_33, %c0_34] : memref<5x128xf32, #tpu.memory_space<vmem>>, vector<5x128xf32>
    %cst_35 = arith.constant dense<0.000000e+00> : vector<2x128xf32>
    %52 = tpu.matmul %45, %51, %cst_35 {dimension_numbers = #tpu.dot_dimension_numbers<[1], [0], [0], [1], [0, 0, 1, 1], [], []>} : vector<2x5xf32>, vector<5x128xf32>, vector<2x128xf32> -> vector<2x128xf32>
    %53 = arith.addf %50, %52 : vector<2x128xf32>
    %c0_36 = arith.constant 0 : index
    %c0_37 = arith.constant 0 : index
    %54 = vector.load %arg13[%c0_36, %c0_37] : memref<1x128xf32, #tpu.memory_space<vmem>>, vector<1x128xf32>
    %55 = vector.broadcast %54 : vector<1x128xf32> to vector<2x128xf32>
    %56 = arith.addf %53, %55 : vector<2x128xf32>
    %c0_38 = arith.constant 0 : index
    %c0_39 = arith.constant 0 : index
    %57 = vector.load %arg14[%c0_38, %c0_39] : memref<2x128xf32, #tpu.memory_space<vmem>>, vector<2x128xf32>
    tpu.vector_store %arg14[%c0_38, %c0_39], %56 {strides = array<i32>} : memref<2x128xf32, #tpu.memory_space<vmem>>, vector<2x128xf32>,
    return
  }
  func.func @transform_0(%arg0: i32) -> (i32, i32) {
    %c0_i32 = arith.constant 0 : i32
    %c0_i32_0 = arith.constant 0 : i32
    return %arg0, %c0_i32 : i32, i32
  }
  func.func @transform_1(%arg0: i32) -> (i32, i32) {
    %c0_i32 = arith.constant 0 : i32
    %c0_i32_0 = arith.constant 0 : i32
    return %arg0, %c0_i32 : i32, i32
  }
  func.func @transform_2(%arg0: i32) -> (i32, i32) {
    %c0_i32 = arith.constant 0 : i32
    %c0_i32_0 = arith.constant 0 : i32
    return %arg0, %c0_i32 : i32, i32
  }
  func.func @transform_3(%arg0: i32) -> (i32, i32) {
    %c0_i32 = arith.constant 0 : i32
    %c0_i32_0 = arith.constant 0 : i32
    %c0_i32_1 = arith.constant 0 : i32
    return %c0_i32, %c0_i32_0 : i32, i32
  }
  func.func @transform_4(%arg0: i32) -> (i32, i32) {
    %c0_i32 = arith.constant 0 : i32
    %c0_i32_0 = arith.constant 0 : i32
    %c0_i32_1 = arith.constant 0 : i32
    return %c0_i32, %c0_i32_0 : i32, i32
  }
  func.func @transform_5(%arg0: i32) -> (i32, i32) {
    %c0_i32 = arith.constant 0 : i32
    %c0_i32_0 = arith.constant 0 : i32
    %c0_i32_1 = arith.constant 0 : i32
    return %c0_i32, %c0_i32_0 : i32, i32
  }
  func.func @transform_6(%arg0: i32) -> (i32, i32) {
    %c0_i32 = arith.constant 0 : i32
    %c0_i32_0 = arith.constant 0 : i32
    %c0_i32_1 = arith.constant 0 : i32
    return %c0_i32, %c0_i32_0 : i32, i32
  }
  func.func @transform_7(%arg0: i32) -> (i32, i32) {
    %c0_i32 = arith.constant 0 : i32
    %c0_i32_0 = arith.constant 0 : i32
    %c0_i32_1 = arith.constant 0 : i32
    return %c0_i32, %c0_i32_0 : i32, i32
  }
  func.func @transform_8(%arg0: i32) -> (i32, i32) {
    %c0_i32 = arith.constant 0 : i32
    %c0_i32_0 = arith.constant 0 : i32
    %c0_i32_1 = arith.constant 0 : i32
    return %c0_i32, %c0_i32_0 : i32, i32
  }
  func.func @transform_9(%arg0: i32) -> (i32, i32) {
    %c0_i32 = arith.constant 0 : i32
    %c0_i32_0 = arith.constant 0 : i32
    %c0_i32_1 = arith.constant 0 : i32
    return %c0_i32, %c0_i32_0 : i32, i32
  }
  func.func @transform_10(%arg0: i32) -> (i32, i32) {
    %c0_i32 = arith.constant 0 : i32
    %c0_i32_0 = arith.constant 0 : i32
    %c0_i32_1 = arith.constant 0 : i32
    return %c0_i32, %c0_i32_0 : i32, i32
  }
  func.func @transform_11(%arg0: i32) -> (i32, i32) {
    %c0_i32 = arith.constant 0 : i32
    %c0_i32_0 = arith.constant 0 : i32
    %c0_i32_1 = arith.constant 0 : i32
    return %c0_i32, %c0_i32_0 : i32, i32
  }
  func.func @transform_12(%arg0: i32) -> (i32, i32) {
    %c0_i32 = arith.constant 0 : i32
    %c0_i32_0 = arith.constant 0 : i32
    %c0_i32_1 = arith.constant 0 : i32
    return %c0_i32, %c0_i32_0 : i32, i32
  }
  func.func @transform_13(%arg0: i32) -> (i32, i32) {
    %c0_i32 = arith.constant 0 : i32
    %c0_i32_0 = arith.constant 0 : i32
    return %arg0, %c0_i32 : i32, i32
  }
}

</mosaic_0001>

<llo_original>
// kernel: tpu_custom_call.1
$region0: #{tpu_custom_call.1}
  #allocation0 [shape = 'u32[]', space=smem, size = 0x4, offset = 0x4, fixed_abs, tag = 'smem constant byte address 0x4 - core index']
  #allocation1 [shape = 'u32[72,128]{1,0:T(1,128)}', space=vmem, size = 0x9000, scoped, tag = 'internal scratch']
  %s0 = inlined_call_operand.vmem [shape: bf16[2,6], index: 0, kind: input, shape index: {}]
  %s1 = inlined_call_operand.vmem [shape: bf16[2,12], index: 1, kind: input, shape index: {}]
  %s2 = inlined_call_operand.vmem [shape: bf16[2,64], index: 2, kind: input, shape index: {}]
  %s3 = inlined_call_operand.vmem [shape: f32[6,5], index: 3, kind: input, shape index: {}]
  %s4 = inlined_call_operand.vmem [shape: f32[64,256], index: 4, kind: input, shape index: {}]
  %s5 = inlined_call_operand.vmem [shape: f32[1,256], index: 5, kind: input, shape index: {}]
  %s6 = inlined_call_operand.vmem [shape: f32[256,5], index: 6, kind: input, shape index: {}]
  %s7 = inlined_call_operand.vmem [shape: f32[1,5], index: 7, kind: input, shape index: {}]
  %s8 = inlined_call_operand.vmem [shape: f32[12,5], index: 8, kind: input, shape index: {}]
  %s9 = inlined_call_operand.vmem [shape: f32[5,128], index: 9, kind: input, shape index: {}]
  %s10 = inlined_call_operand.vmem [shape: f32[5,128], index: 10, kind: input, shape index: {}]
  %s11 = inlined_call_operand.vmem [shape: f32[5,128], index: 11, kind: input, shape index: {}]
  %s12 = inlined_call_operand.vmem [shape: f32[1,128], index: 12, kind: input, shape index: {}]
  %s13 = inlined_call_operand.hbm [shape: f32[2,128], index: 13, kind: output, shape index: {}]
  %s14 = sld [smem:[#allocation0]]
  $region62: #{tpu_custom_call.1} parent=0
    _
  %s16 = ssub.s32 1, %s14
  %s17 = scalar_select 0, %s16, %s14
  $region1: #{tpu_custom_call.1} parent=0
    #allocation2 [shape = 'u8[1024]{0}', space=vmem, size = 0x400, scoped, tag = 'output window, operand 0, single buffered']
    #allocation3 [shape = 's32[1]{0}', space=sflag, size = 0x4, scoped, tag = 'scoped memory for tpu_custom_call.1']
    %18 = vsyncpa [#allocation3], 0
    // Predicated region
    $region2: #{tpu_custom_call.1} parent=1 // pred_check
      _
    $region3: #{tpu_custom_call.1} parent=1 // pred_check_branch
      %20 = sbr.rel (0) target = $region5
    $region4: #{tpu_custom_call.1} parent=1 // pred_region
      _
    $region5: #{tpu_custom_call.1} parent=1 // pred_fallthru
      _
    // Predicated region
    $region6: #{tpu_custom_call.1} parent=1 // pred_check
      _
    $region7: #{tpu_custom_call.1} parent=1 // pred_check_branch
      %22 = sbr.rel (0) target = $region9
    $region8: #{tpu_custom_call.1} parent=1 // pred_region
      _
    $region9: #{tpu_custom_call.1} parent=1 // pred_fallthru
      _
    // Predicated region
    $region10: #{tpu_custom_call.1} parent=1 // pred_check
      _
    $region11: #{tpu_custom_call.1} parent=1 // pred_check_branch
      %24 = sbr.rel (0) target = $region13
    $region12: #{tpu_custom_call.1} parent=1 // pred_region
      _
    $region13: #{tpu_custom_call.1} parent=1 // pred_fallthru
      _
    // Predicated region
    $region14: #{tpu_custom_call.1} parent=1 // pred_check
      _
    $region15: #{tpu_custom_call.1} parent=1 // pred_check_branch
      %26 = sbr.rel (0) target = $region17
    $region16: #{tpu_custom_call.1} parent=1 // pred_region
      _
    $region17: #{tpu_custom_call.1} parent=1 // pred_fallthru
      _
    // Predicated region
    $region18: #{tpu_custom_call.1} parent=1 // pred_check
      _
    $region19: #{tpu_custom_call.1} parent=1 // pred_check_branch
      %28 = sbr.rel (0) target = $region21
    $region20: #{tpu_custom_call.1} parent=1 // pred_region
      _
    $region21: #{tpu_custom_call.1} parent=1 // pred_fallthru
      _
    // Predicated region
    $region22: #{tpu_custom_call.1} parent=1 // pred_check
      _
    $region23: #{tpu_custom_call.1} parent=1 // pred_check_branch
      %30 = sbr.rel (0) target = $region25
    $region24: #{tpu_custom_call.1} parent=1 // pred_region
      _
    $region25: #{tpu_custom_call.1} parent=1 // pred_fallthru
      _
    // Predicated region
    $region26: #{tpu_custom_call.1} parent=1 // pred_check
      _
    $region27: #{tpu_custom_call.1} parent=1 // pred_check_branch
      %32 = sbr.rel (0) target = $region29
    $region28: #{tpu_custom_call.1} parent=1 // pred_region
      _
    $region29: #{tpu_custom_call.1} parent=1 // pred_fallthru
      _
    // Predicated region
    $region30: #{tpu_custom_call.1} parent=1 // pred_check
      _
    $region31: #{tpu_custom_call.1} parent=1 // pred_check_branch
      %34 = sbr.rel (0) target = $region33
    $region32: #{tpu_custom_call.1} parent=1 // pred_region
      _
    $region33: #{tpu_custom_call.1} parent=1 // pred_fallthru
      _
    // Predicated region
    $region34: #{tpu_custom_call.1} parent=1 // pred_check
      _
    $region35: #{tpu_custom_call.1} parent=1 // pred_check_branch
      %36 = sbr.rel (0) target = $region37
    $region36: #{tpu_custom_call.1} parent=1 // pred_region
      _
    $region37: #{tpu_custom_call.1} parent=1 // pred_fallthru
      _
    // Predicated region
    $region38: #{tpu_custom_call.1} parent=1 // pred_check
      _
    $region39: #{tpu_custom_call.1} parent=1 // pred_check_branch
      %38 = sbr.rel (0) target = $region41
    $region40: #{tpu_custom_call.1} parent=1 // pred_region
      _
    $region41: #{tpu_custom_call.1} parent=1 // pred_fallthru
      _
    // Predicated region
    $region42: #{tpu_custom_call.1} parent=1 // pred_check
      _
    $region43: #{tpu_custom_call.1} parent=1 // pred_check_branch
      %40 = sbr.rel (0) target = $region45
    $region44: #{tpu_custom_call.1} parent=1 // pred_region
      _
    $region45: #{tpu_custom_call.1} parent=1 // pred_fallthru
      _
    // Predicated region
    $region46: #{tpu_custom_call.1} parent=1 // pred_check
      _
    $region47: #{tpu_custom_call.1} parent=1 // pred_check_branch
      %42 = sbr.rel (0) target = $region49
    $region48: #{tpu_custom_call.1} parent=1 // pred_region
      _
    $region49: #{tpu_custom_call.1} parent=1 // pred_fallthru
      _
    // Predicated region
    $region50: #{tpu_custom_call.1} parent=1 // pred_check
      _
    $region51: #{tpu_custom_call.1} parent=1 // pred_check_branch
      %44 = sbr.rel (0) target = $region53
    $region52: #{tpu_custom_call.1} parent=1 // pred_region
      _
    $region53: #{tpu_custom_call.1} parent=1 // pred_fallthru
      _
    %v45 = vld [vmem:[%s0] sm:$0x1]
    %v46 = vunpack.c.l.bf16 %v45
    %v47 = vld [vmem:[%s1] sm:$0x1]
    %v48 = vunpack.c.l.bf16 %v47
    %v49 = vld [vmem:[%s2] sm:$0x1]
    %v50 = vunpack.c.l.bf16 %v49
    %v51 = vld [vmem:[%s3] sm:$0x3f]
    %vm52 = vcmask 48128
    %v54 = vsel %vm52, %v46, 0
    %vm56 = vcmask 1045504
    %v58 = vsel %vm56, %v51, 0
    %60 = vmatpush.msra.mxu0 0.0
    %61 = vmatpush.msra.mxu0 0.0
    %62 = vmatpush.msra.mxu0 0.0
    %63 = vmatpush.msra.mxu0 0.0
    %64 = vmatpush.msra.mxu0 0.0
    %65 = vmatpush.msra.mxu0 0.0
    %66 = vmatpush.msra.mxu0 0.0
    %67 = vmatpush.msra.mxu0 0.0
    %68 = vmatpush.msra.mxu0 0.0
    %69 = vmatpush.msra.mxu0 0.0
    %70 = vmatpush.msra.mxu0 0.0
    %71 = vmatpush.msra.mxu0 0.0
    %72 = vmatpush.msra.mxu0 0.0
    %73 = vmatpush.msra.mxu0 0.0
    %74 = vmatpush.msra.mxu0 0.0
    %75 = vmatpush.msra.mxu0 %v58
    %76 = vmatmul.f32.gmra.mxu0 %v54
    %v77 = vpop.f32.mrf.mxu0
    %v78 = vadd.f32 0.0, %v77
    %79 = vdwg.mxu0
    %v80 = vld [vmem:[%s4] sm:$0xff]
    %v81 = vld [vmem:[%s4 + $0x8] sm:$0xff]
    %v82 = vld [vmem:[%s4 + $0x10] sm:$0xff]
    %v83 = vld [vmem:[%s4 + $0x18] sm:$0xff]
    %v84 = vld [vmem:[%s4 + $0x20] sm:$0xff]
    %v85 = vld [vmem:[%s4 + $0x28] sm:$0xff]
    %v86 = vld [vmem:[%s4 + $0x30] sm:$0xff]
    %v87 = vld [vmem:[%s4 + $0x38] sm:$0xff]
    %v88 = vld [vmem:[%s4 + $0x40] sm:$0xff]
    %v89 = vld [vmem:[%s4 + $0x48] sm:$0xff]
    %v90 = vld [vmem:[%s4 + $0x50] sm:$0xff]
    %v91 = vld [vmem:[%s4 + $0x58] sm:$0xff]
    %v92 = vld [vmem:[%s4 + $0x60] sm:$0xff]
    %v93 = vld [vmem:[%s4 + $0x68] sm:$0xff]
    %v94 = vld [vmem:[%s4 + $0x70] sm:$0xff]
    %v95 = vld [vmem:[%s4 + $0x78] sm:$0xff]
    %v96 = vld [vmem:[%s5] sm:$0x3]
    %v98 = vperm.slane %v96, 0
    %v99 = vperm.slane %v96, 1
    %vm102 = vcmask 523264
    %v104 = vsel %vm102, %v50, 0
    %106 = vmatpush.msra.mxu0 0.0
    %107 = vmatpush.msra.mxu0 0.0
    %108 = vmatpush.msra.mxu0 0.0
    %109 = vmatpush.msra.mxu0 0.0
    %110 = vmatpush.msra.mxu0 0.0
    %111 = vmatpush.msra.mxu0 0.0
    %112 = vmatpush.msra.mxu0 0.0
    %113 = vmatpush.msra.mxu0 0.0
    %114 = vmatpush.msra.mxu0 %v94
    %115 = vmatpush.msra.mxu0 %v92
    %116 = vmatpush.msra.mxu0 %v90
    %117 = vmatpush.msra.mxu0 %v88
    %118 = vmatpush.msra.mxu0 %v86
    %119 = vmatpush.msra.mxu0 %v84
    %120 = vmatpush.msra.mxu0 %v82
    %121 = vmatpush.msra.mxu0 %v80
    %122 = vmatmul.f32.gmra.mxu0 %v104
    %v123 = vpop.f32.mrf.mxu0
    %v124 = vadd.f32 %v98, %v123
    %125 = vdwg.mxu0
    %126 = vmatpush.msra.mxu0 0.0
    %127 = vmatpush.msra.mxu0 0.0
    %128 = vmatpush.msra.mxu0 0.0
    %129 = vmatpush.msra.mxu0 0.0
    %130 = vmatpush.msra.mxu0 0.0
    %131 = vmatpush.msra.mxu0 0.0
    %132 = vmatpush.msra.mxu0 0.0
    %133 = vmatpush.msra.mxu0 0.0
    %134 = vmatpush.msra.mxu0 %v95
    %135 = vmatpush.msra.mxu0 %v93
    %136 = vmatpush.msra.mxu0 %v91
    %137 = vmatpush.msra.mxu0 %v89
    %138 = vmatpush.msra.mxu0 %v87
    %139 = vmatpush.msra.mxu0 %v85
    %140 = vmatpush.msra.mxu0 %v83
    %141 = vmatpush.msra.mxu0 %v81
    %142 = vmatmul.f32.gmra.mxu0 %v104
    %v143 = vpop.f32.mrf.mxu0
    %v144 = vadd.f32 %v99, %v143
    %145 = vdwg.mxu0
    %v146 = vmax.f32 %v124, 0.0
    %v147 = vmax.f32 %v144, 0.0
    %v148 = vld [vmem:[%s6] sm:$0xff]
    %v149 = vld [vmem:[%s6 + $0x8] sm:$0xff]
    %v150 = vld [vmem:[%s6 + $0x10] sm:$0xff]
    %v151 = vld [vmem:[%s6 + $0x18] sm:$0xff]
    %v152 = vld [vmem:[%s6 + $0x20] sm:$0xff]
    %v153 = vld [vmem:[%s6 + $0x28] sm:$0xff]
    %v154 = vld [vmem:[%s6 + $0x30] sm:$0xff]
    %v155 = vld [vmem:[%s6 + $0x38] sm:$0xff]
    %v156 = vld [vmem:[%s6 + $0x40] sm:$0xff]
    %v157 = vld [vmem:[%s6 + $0x48] sm:$0xff]
    %v158 = vld [vmem:[%s6 + $0x50] sm:$0xff]
    %v159 = vld [vmem:[%s6 + $0x58] sm:$0xff]
    %v160 = vld [vmem:[%s6 + $0x60] sm:$0xff]
    %v161 = vld [vmem:[%s6 + $0x68] sm:$0xff]
    %v162 = vld [vmem:[%s6 + $0x70] sm:$0xff]
    %v163 = vld [vmem:[%s6 + $0x78] sm:$0xff]
    %v164 = vld [vmem:[%s6 + $0x80] sm:$0xff]
    %v165 = vld [vmem:[%s6 + $0x88] sm:$0xff]
    %v166 = vld [vmem:[%s6 + $0x90] sm:$0xff]
    %v167 = vld [vmem:[%s6 + $0x98] sm:$0xff]
    %v168 = vld [vmem:[%s6 + $0xa0] sm:$0xff]
    %v169 = vld [vmem:[%s6 + $0xa8] sm:$0xff]
    %v170 = vld [vmem:[%s6 + $0xb0] sm:$0xff]
    %v171 = vld [vmem:[%s6 + $0xb8] sm:$0xff]
    %v172 = vld [vmem:[%s6 + $0xc0] sm:$0xff]
    %v173 = vld [vmem:[%s6 + $0xc8] sm:$0xff]
    %v174 = vld [vmem:[%s6 + $0xd0] sm:$0xff]
    %v175 = vld [vmem:[%s6 + $0xd8] sm:$0xff]
    %v176 = vld [vmem:[%s6 + $0xe0] sm:$0xff]
    %v177 = vld [vmem:[%s6 + $0xe8] sm:$0xff]
    %v178 = vld [vmem:[%s6 + $0xf0] sm:$0xff]
    %v179 = vld [vmem:[%s6 + $0xf8] sm:$0xff]
    %v180 = vld [vmem:[%s7] sm:$0x1]
    %v182 = vperm.slane %v180, 0
    %184 = vmatpush.msra.mxu0 %v163
    %185 = vmatpush.msra.mxu0 %v162
    %186 = vmatpush.msra.mxu0 %v161
    %187 = vmatpush.msra.mxu0 %v160
    %188 = vmatpush.msra.mxu0 %v159
    %189 = vmatpush.msra.mxu0 %v158
    %190 = vmatpush.msra.mxu0 %v157
    %191 = vmatpush.msra.mxu0 %v156
    %192 = vmatpush.msra.mxu0 %v155
    %193 = vmatpush.msra.mxu0 %v154
    %194 = vmatpush.msra.mxu0 %v153
    %195 = vmatpush.msra.mxu0 %v152
    %196 = vmatpush.msra.mxu0 %v151
    %197 = vmatpush.msra.mxu0 %v150
    %198 = vmatpush.msra.mxu0 %v149
    %199 = vmatpush.msra.mxu0 %v148
    %200 = vmatmul.f32.gmra.mxu0 %v146
    %v201 = vpop.f32.mrf.mxu0
    %v202 = vadd.f32 %v182, %v201
    %203 = vdwg.mxu0
    %204 = vmatpush.msra.mxu0 %v179
    %205 = vmatpush.msra.mxu0 %v178
    %206 = vmatpush.msra.mxu0 %v177
    %207 = vmatpush.msra.mxu0 %v176
    %208 = vmatpush.msra.mxu0 %v175
    %209 = vmatpush.msra.mxu0 %v174
    %210 = vmatpush.msra.mxu0 %v173
    %211 = vmatpush.msra.mxu0 %v172
    %212 = vmatpush.msra.mxu0 %v171
    %213 = vmatpush.msra.mxu0 %v170
    %214 = vmatpush.msra.mxu0 %v169
    %215 = vmatpush.msra.mxu0 %v168
    %216 = vmatpush.msra.mxu0 %v167
    %217 = vmatpush.msra.mxu0 %v166
    %218 = vmatpush.msra.mxu0 %v165
    %219 = vmatpush.msra.mxu0 %v164
    %220 = vmatmul.f32.gmra.mxu0 %v147
    %v221 = vpop.f32.mrf.mxu0
    %v222 = vadd.f32 %v202, %v221
    %223 = vdwg.mxu0
    %v224 = vld [vmem:[%s8] sm:$0xff]
    %v225 = vld [vmem:[%s8 + $0x8] sm:$0xf]
    %vm226 = vcmask 97280
    %v228 = vsel %vm226, %v48, 0
    %vm230 = vcmask 1043456
    %v232 = vsel %vm230, %v225, 0
    %234 = vmatpush.msra.mxu0 0.0
    %235 = vmatpush.msra.mxu0 0.0
    %236 = vmatpush.msra.mxu0 0.0
    %237 = vmatpush.msra.mxu0 0.0
    %238 = vmatpush.msra.mxu0 0.0
    %239 = vmatpush.msra.mxu0 0.0
    %240 = vmatpush.msra.mxu0 0.0
    %241 = vmatpush.msra.mxu0 0.0
    %242 = vmatpush.msra.mxu0 0.0
    %243 = vmatpush.msra.mxu0 0.0
    %244 = vmatpush.msra.mxu0 0.0
    %245 = vmatpush.msra.mxu0 0.0
    %246 = vmatpush.msra.mxu0 0.0
    %247 = vmatpush.msra.mxu0 0.0
    %248 = vmatpush.msra.mxu0 %v232
    %249 = vmatpush.msra.mxu0 %v224
    %250 = vmatmul.f32.gmra.mxu0 %v228
    %v251 = vpop.f32.mrf.mxu0
    %v252 = vadd.f32 0.0, %v251
    %253 = vdwg.mxu0
    %v254 = vmul.f32 %v78, %v78
    %vm255 = vcmask 33792
    %v256 = vsel %vm255, %v254, 0.0
    %257 = vadd.xlane.f32.xlu0 %v256
    %v258 = vpop.xlane.xlu0 %257
    %v259 = vadd.f32 %v258, 1e-12
    %v260 = vrsqrt.pop %v259
    %v261 = vmul.f32 %v260, %v259
    %v262 = vmul.f32 %v261, %v260
    %v263 = vmul.f32 0.5, %v262
    %v264 = vsub.f32 1.5, %v263
    %v265 = vmul.f32 %v260, %v264
    %vm266 = vweird.f32 %v259
    %vm267 = vweird.f32 %v260
    %vm268 = vmor %vm266, %vm267
    %v269 = vsel %vm268, %v260, %v265
    %v270 = vmul.f32 %v78, %v269
    %v271 = vmul.f32 %v222, %v222
    %v272 = vsel %vm255, %v271, 0.0
    %273 = vadd.xlane.f32.xlu0 %v272
    %v274 = vpop.xlane.xlu0 %273
    %v275 = vadd.f32 %v274, 1e-12
    %v276 = vrsqrt.pop %v275
    %v277 = vmul.f32 %v276, %v275
    %v278 = vmul.f32 %v277, %v276
    %v279 = vmul.f32 0.5, %v278
    %v280 = vsub.f32 1.5, %v279
    %v281 = vmul.f32 %v276, %v280
    %vm282 = vweird.f32 %v275
    %vm283 = vweird.f32 %v276
    %vm284 = vmor %vm282, %vm283
    %v285 = vsel %vm284, %v276, %v281
    %v286 = vmul.f32 %v222, %v285
    %v287 = vmul.f32 %v252, %v252
    %v288 = vsel %vm255, %v287, 0.0
    %289 = vadd.xlane.f32.xlu0 %v288
    %v290 = vpop.xlane.xlu0 %289
    %v291 = vadd.f32 %v290, 1e-12
    %v292 = vrsqrt.pop %v291
    %v293 = vmul.f32 %v292, %v291
    %v294 = vmul.f32 %v293, %v292
    %v295 = vmul.f32 0.5, %v294
    %v296 = vsub.f32 1.5, %v295
    %v297 = vmul.f32 %v292, %v296
    %vm298 = vweird.f32 %v291
    %vm299 = vweird.f32 %v292
    %vm300 = vmor %vm298, %vm299
    %v301 = vsel %vm300, %v292, %v297
    %v302 = vmul.f32 %v252, %v301
    %v303 = vld [vmem:[%s9] sm:$0x1f]
    %v304 = vld [vmem:[%s10] sm:$0x1f]
    %vm305 = vcmask 39936
    %v307 = vsel %vm305, %v286, 0
    %vm309 = vcmask 1044480
    %v311 = vsel %vm309, %v304, 0
    %313 = vmatpush.msra.mxu0 0.0
    %314 = vmatpush.msra.mxu0 0.0
    %315 = vmatpush.msra.mxu0 0.0
    %316 = vmatpush.msra.mxu0 0.0
    %317 = vmatpush.msra.mxu0 0.0
    %318 = vmatpush.msra.mxu0 0.0
    %319 = vmatpush.msra.mxu0 0.0
    %320 = vmatpush.msra.mxu0 0.0
    %321 = vmatpush.msra.mxu0 0.0
    %322 = vmatpush.msra.mxu0 0.0
    %323 = vmatpush.msra.mxu0 0.0
    %324 = vmatpush.msra.mxu0 0.0
    %325 = vmatpush.msra.mxu0 0.0
    %326 = vmatpush.msra.mxu0 0.0
    %327 = vmatpush.msra.mxu0 0.0
    %328 = vmatpush.msra.mxu0 %v311
    %329 = vmatmul.f32.gmra.mxu0 %v307
    %v330 = vpop.f32.mrf.mxu0
    %v331 = vadd.f32 0.0, %v330
    %332 = vdwg.mxu0
    %v334 = vsel %vm305, %v270, 0
    %v337 = vsel %vm309, %v303, 0
    %339 = vmatpush.msra.mxu0 0.0
    %340 = vmatpush.msra.mxu0 0.0
    %341 = vmatpush.msra.mxu0 0.0
    %342 = vmatpush.msra.mxu0 0.0
    %343 = vmatpush.msra.mxu0 0.0
    %344 = vmatpush.msra.mxu0 0.0
    %345 = vmatpush.msra.mxu0 0.0
    %346 = vmatpush.msra.mxu0 0.0
    %347 = vmatpush.msra.mxu0 0.0
    %348 = vmatpush.msra.mxu0 0.0
    %349 = vmatpush.msra.mxu0 0.0
    %350 = vmatpush.msra.mxu0 0.0
    %351 = vmatpush.msra.mxu0 0.0
    %352 = vmatpush.msra.mxu0 0.0
    %353 = vmatpush.msra.mxu0 0.0
    %354 = vmatpush.msra.mxu0 %v337
    %355 = vmatmul.f32.gmra.mxu0 %v334
    %v356 = vpop.f32.mrf.mxu0
    %v357 = vadd.f32 %v331, %v356
    %358 = vdwg.mxu0
    %v359 = vld [vmem:[%s11] sm:$0x1f]
    %v361 = vsel %vm305, %v302, 0
    %v364 = vsel %vm309, %v359, 0
    %366 = vmatpush.msra.mxu0 0.0
    %367 = vmatpush.msra.mxu0 0.0
    %368 = vmatpush.msra.mxu0 0.0
    %369 = vmatpush.msra.mxu0 0.0
    %370 = vmatpush.msra.mxu0 0.0
    %371 = vmatpush.msra.mxu0 0.0
    %372 = vmatpush.msra.mxu0 0.0
    %373 = vmatpush.msra.mxu0 0.0
    %374 = vmatpush.msra.mxu0 0.0
    %375 = vmatpush.msra.mxu0 0.0
    %376 = vmatpush.msra.mxu0 0.0
    %377 = vmatpush.msra.mxu0 0.0
    %378 = vmatpush.msra.mxu0 0.0
    %379 = vmatpush.msra.mxu0 0.0
    %380 = vmatpush.msra.mxu0 0.0
    %381 = vmatpush.msra.mxu0 %v364
    %382 = vmatmul.f32.gmra.mxu0 %v361
    %v383 = vpop.f32.mrf.mxu0
    %v384 = vadd.f32 0.0, %v383
    %385 = vdwg.mxu0
    %v386 = vadd.f32 %v357, %v384
    %v387 = vld [vmem:[%s12] sm:$0x1]
    %v389 = vperm.slane %v387, 0
    %v391 = vadd.f32 %v386, %v389
    %392 = vst [vmem:[#allocation2] sm:$0x3] %v391
    // Predicated region
    $region54: #{tpu_custom_call.1} parent=1 // pred_check
      _
    $region55: #{tpu_custom_call.1} parent=1 // pred_check_branch
      %394 = sbr.rel (0) target = $region57
    $region56: #{tpu_custom_call.1} parent=1 // pred_region
      %396 = vsyncadd [#allocation3], 0
      %s398 = sshll.u32 [#allocation2], 4
      %s399 = int_to_ptr.vmem [resolvable:$true] %s398
      %s400 = sshll.u32 %s13, 4
      %s401 = int_to_ptr.hbm [resolvable:$true] %s400
      %403 = dma.vmem_to_hbm [thread:$0]  %s399, 32, %s401, [#allocation3]
    $region57: #{tpu_custom_call.1} parent=1 // pred_fallthru
      _
    // Predicated region
    $region58: #{tpu_custom_call.1} parent=1 // pred_check
      _
    $region59: #{tpu_custom_call.1} parent=1 // pred_check_branch
      %405 = sbr.rel (0) target = $region61
    $region60: #{tpu_custom_call.1} parent=1 // pred_region
      %407 = dma.done [#allocation3], 32
    $region61: #{tpu_custom_call.1} parent=1 // pred_fallthru
      _
    %408 = vsyncpa [#allocation3], 1

</llo_original>
